<compile_context>
chip_gen: v6e
topology: v6e:2x2x1
jax: 0.10.0
libtpu: 0.0.40
codegen_flags: <defaults>
</compile_context>

<pallas_src>
import jax
import jax.numpy as jnp
from jax.experimental import pallas as pl
from jax.experimental.pallas import tpu as pltpu


# ---------------------------------------------------------------------------
# Fused kernel: masked per-point encoder MLP + MXU sum-pool + decoder MLP
# ---------------------------------------------------------------------------
def sae_kernel(n_points_ref,                       # SMEM scalar-prefetch: (B,) int32
               x_ref,                              # (1, C, TN) input tile, Conv1d NCL layout
               enc1_ref, enc2_ref, enc3_ref,       # packed encoder layers [W | bias], (out, in+1)
               dec1_ref, dec2_ref, dec3_ref,       # packed decoder layers [W ; bias], (in+1, out)
               out_ref,                            # (1, 1, C*N) lane-dense output row
               acc_ref):                           # VMEM scratch (1, L): latent accumulator
    b = pl.program_id(0)
    nt = pl.program_id(1)

    _, C, TN = x_ref.shape
    D = enc2_ref.shape[0]
    L = enc3_ref.shape[0]

    @pl.when(nt == 0)
    def _init():
        acc_ref[...] = jnp.zeros_like(acc_ref)

    # Validity mask for this tile of points, built in-kernel from iota + the SMEM scalar.
    npts = n_points_ref[b]
    pidx = jax.lax.broadcasted_iota(jnp.int32, (1, TN), 1) + nt * TN
    mask = (pidx < npts).astype(jnp.float32)                                   # (1, TN)

    # Zero padded points so non-finite padding can never leak through 0*Inf into the latent.
    x_b = x_ref[0] * mask                                                      # (C, TN)

    # ---- encoder: per-point 1x1 convs in conv-native layout (channels x points) ----
    h = (jnp.dot(enc1_ref[:, :C], x_b, preferred_element_type=jnp.float32)
         + enc1_ref[:, C:C + 1] * mask                                         # mask input channel
         + enc1_ref[:, C + 1:C + 2])                                           # bias column
    h = jnp.maximum(h, 0.0)                                                    # (D, TN)
    h = jnp.dot(enc2_ref[:, :D], h, preferred_element_type=jnp.float32) + enc2_ref[:, D:D + 1]
    h = jnp.maximum(h, 0.0)                                                    # (D, TN)
    f = jnp.dot(enc3_ref[:, :D], h, preferred_element_type=jnp.float32) + enc3_ref[:, D:D + 1]  # (L, TN)

    # ---- masked SUM pool over the point tile, on the MXU: (1,TN) @ (L,TN)^T -> (1, L) ----
    acc_ref[...] += jax.lax.dot_general(
        mask, f, (((1,), (1,)), ((), ())), preferred_element_type=jnp.float32)

    # ---- decoder MLP + lane-dense store, only on the last point tile ----
    @pl.when(nt == pl.num_programs(1) - 1)
    def _decode():
        latent = acc_ref[...]                                                  # (1, L)
        d = jnp.dot(latent, dec1_ref[:L, :], preferred_element_type=jnp.float32) + dec1_ref[L:L + 1, :]
        d = jnp.maximum(d, 0.0)
        d = jnp.dot(d, dec2_ref[:D, :], preferred_element_type=jnp.float32) + dec2_ref[D:D + 1, :]
        d = jnp.maximum(d, 0.0)
        out_ref[0] = jnp.dot(d, dec3_ref[:D, :], preferred_element_type=jnp.float32) + dec3_ref[D:D + 1, :]


# ---------------------------------------------------------------------------
# Parameter init (xavier_uniform_ on weights, zero bias — matches SAE.__init__),
# packed as one [weight | bias] buffer per layer.
# ---------------------------------------------------------------------------
def _xavier(key, fan_in, fan_out, shape):
    bound = (6.0 / (fan_in + fan_out)) ** 0.5
    return jax.random.uniform(key, shape, jnp.float32, -bound, bound)


def init_params(key, C, N, dim, latent_dim):
    ks = jax.random.split(key, 6)
    # Encoder 1x1 convs in Conv1d (out, in) layout over channels [x_0..x_{C-1}, mask],
    # bias folded in as one extra column.
    enc1 = jnp.concatenate([_xavier(ks[0], C + 1, dim, (dim, C + 1)),
                            jnp.zeros((dim, 1), jnp.float32)], axis=1)              # (dim, C+2)
    enc2 = jnp.concatenate([_xavier(ks[1], dim, dim, (dim, dim)),
                            jnp.zeros((dim, 1), jnp.float32)], axis=1)              # (dim, dim+1)
    enc3 = jnp.concatenate([_xavier(ks[2], dim, latent_dim, (latent_dim, dim)),
                            jnp.zeros((latent_dim, 1), jnp.float32)], axis=1)       # (L, dim+1)
    # Decoder Linears stored (in, out) for right-multiplication, bias folded as the last row.
    dec1 = jnp.concatenate([_xavier(ks[3], latent_dim, dim, (latent_dim, dim)),
                            jnp.zeros((1, dim), jnp.float32)], axis=0)              # (L+1, dim)
    dec2 = jnp.concatenate([_xavier(ks[4], dim, dim, (dim, dim)),
                            jnp.zeros((1, dim), jnp.float32)], axis=0)              # (dim+1, dim)
    dec3 = jnp.concatenate([_xavier(ks[5], dim, C * N, (dim, C * N)),
                            jnp.zeros((1, C * N), jnp.float32)], axis=0)            # (dim+1, C*N)
    return enc1, enc2, enc3, dec1, dec2, dec3


# ---------------------------------------------------------------------------
# Wrapper: grid/BlockSpec setup + pallas_call (no wrapper-side data movement)
# ---------------------------------------------------------------------------
def _point_tile(n):
    for t in (512, 256, 128):
        if n % t == 0:
            return t
    return n           # small / unaligned N: single full tile


def sae_forward(x, n_points, params):
    B, C, N = x.shape                                   # NCL, as PyTorch Conv1d
    enc1, enc2, enc3, dec1, dec2, dec3 = params
    L = enc3.shape[0]
    CN = dec3.shape[1]
    assert CN == C * N

    tn = _point_tile(N)
    n_tiles = N // tn

    def full(a):        # whole-array resident block (weights), constant across the grid
        return pl.BlockSpec(a.shape, lambda b, t, npts, _nd=a.ndim: (0,) * _nd)

    grid_spec = pltpu.PrefetchScalarGridSpec(
        num_scalar_prefetch=1,
        grid=(B, n_tiles),
        in_specs=[
            pl.BlockSpec((1, C, tn), lambda b, t, npts: (b, 0, t)),
            full(enc1), full(enc2), full(enc3),
            full(dec1), full(dec2), full(dec3),
        ],
        out_specs=pl.BlockSpec((1, 1, CN), lambda b, t, npts: (b, 0, 0)),
        scratch_shapes=[pltpu.VMEM((1, L), jnp.float32)],
    )

    out = pl.pallas_call(
        sae_kernel,
        out_shape=jax.ShapeDtypeStruct((B, 1, CN), jnp.float32),
        grid_spec=grid_spec,
        compiler_params=pltpu.CompilerParams(
            dimension_semantics=("parallel", "arbitrary")),
    )(jnp.asarray(n_points, jnp.int32), x, enc1, enc2, enc3, dec1, dec2, dec3)

    # reconstruction.view(x_size): (B, C*N) -> (B, C, N) is a free, contiguous reshape.
    return out.reshape(B, C, N)


# ---------------------------------------------------------------------------
# Pure-JAX reference for the correctness check.
# ---------------------------------------------------------------------------
def sae_reference(x, n_points, params):
    enc1, enc2, enc3, dec1, dec2, dec3 = params
    B, C, N = x.shape
    D = enc2.shape[0]
    L = enc3.shape[0]
    mask = (jnp.arange(N)[None, :] < n_points[:, None]).astype(jnp.float32)       # (B, N)
    xm = jnp.concatenate([x, mask[:, None, :]], axis=1)                           # (B, C+1, N)
    h = jax.nn.relu(jnp.einsum('oc,bcn->bon', enc1[:, :C + 1], xm) + enc1[:, C + 1][None, :, None])
    h = jax.nn.relu(jnp.einsum('oc,bcn->bon', enc2[:, :D], h) + enc2[:, D][None, :, None])
    f = jnp.einsum('oc,bcn->bon', enc3[:, :D], h) + enc3[:, D][None, :, None]     # (B, L, N)
    latent = jnp.sum(f * mask[:, None, :], axis=2)                                # (B, L)
    d = jax.nn.relu(latent @ dec1[:L] + dec1[L])
    d = jax.nn.relu(d @ dec2[:D] + dec2[D])
    out = d @ dec3[:D] + dec3[D]                                                  # (B, C*N)
    return out.reshape(B, C, N)


if __name__ == "__main__":
    B, C, N = 2, 2, 16              # batch, input_channels (SAE default 2), set size
    dim, latent_dim = 32, 16

    key = jax.random.PRNGKey(0)
    k_x, k_p = jax.random.split(key)
    x = jax.random.normal(k_x, (B, C, N), jnp.float32)        # point sets, NCL (Conv1d) layout
    n_points = jnp.array([16, 10], jnp.int32)                 # valid points per set
    params = init_params(k_p, C, N, dim, latent_dim)

    recon = jax.block_until_ready(sae_forward(x, n_points, params))
    assert recon.shape == x.shape and recon.dtype == jnp.float32

    ref = sae_reference(x, n_points, params)
    assert jnp.allclose(recon, ref, atol=1e-4, rtol=1e-4), float(jnp.max(jnp.abs(recon - ref)))

    print("KERNEL_OK")
</pallas_src>

<mosaic_0001>
module attributes {stable_mosaic.version = 11 : i64} {
  func.func @sae_kernel(%arg0: i32, %arg1: i32, %arg2: memref<2xi32, #tpu.memory_space<smem>>, %arg3: memref<1x2x16xf32, #tpu.memory_space<vmem>>, %arg4: memref<32x4xf32, #tpu.memory_space<vmem>>, %arg5: memref<32x33xf32, #tpu.memory_space<vmem>>, %arg6: memref<16x33xf32, #tpu.memory_space<vmem>>, %arg7: memref<17x32xf32, #tpu.memory_space<vmem>>, %arg8: memref<33x32xf32, #tpu.memory_space<vmem>>, %arg9: memref<33x32xf32, #tpu.memory_space<vmem>>, %arg10: memref<1x1x32xf32, #tpu.memory_space<vmem>>, %arg11: memref<1x16xf32, #tpu.memory_space<vmem>>) attributes {dimension_semantics = [#tpu.dimension_semantics<parallel>, #tpu.dimension_semantics<arbitrary>], iteration_bounds = array<i64: 2, 1>, scalar_prefetch = 1 : i64, scratch_operands = 1 : i64, tpu.core_type = #tpu.core_type<tc>, window_params = [{transform_indices = @transform_0, window_bounds = array<i64: 1, 2, 16>}, {pipeline_mode = #tpu.pipeline_mode<synchronous>, transform_indices = @transform_1, window_bounds = array<i64: 32, 4>}, {pipeline_mode = #tpu.pipeline_mode<synchronous>, transform_indices = @transform_2, window_bounds = array<i64: 32, 33>}, {pipeline_mode = #tpu.pipeline_mode<synchronous>, transform_indices = @transform_3, window_bounds = array<i64: 16, 33>}, {pipeline_mode = #tpu.pipeline_mode<synchronous>, transform_indices = @transform_4, window_bounds = array<i64: 17, 32>}, {pipeline_mode = #tpu.pipeline_mode<synchronous>, transform_indices = @transform_5, window_bounds = array<i64: 33, 32>}, {pipeline_mode = #tpu.pipeline_mode<synchronous>, transform_indices = @transform_6, window_bounds = array<i64: 33, 32>}, {transform_indices = @transform_7, window_bounds = array<i64: 1, 1, 32>}]} {
    %c0_i32 = arith.constant 0 : i32
    %0 = arith.cmpi eq, %arg1, %c0_i32 : i32
    %1 = arith.extui %0 : i1 to i32
    %c0_i32_0 = arith.constant 0 : i32
    %2 = arith.cmpi ne, %1, %c0_i32_0 : i32
    scf.if %2 {
      %cst_25 = arith.constant 0.000000e+00 : f32
      %48 = vector.broadcast %cst_25 : f32 to vector<1x16xf32>
      %c0_26 = arith.constant 0 : index
      %c0_27 = arith.constant 0 : index
      %49 = vector.load %arg11[%c0_26, %c0_27] : memref<1x16xf32, #tpu.memory_space<vmem>>, vector<1x16xf32>
      tpu.vector_store %arg11[%c0_26, %c0_27], %48 {strides = array<i32>} : memref<1x16xf32, #tpu.memory_space<vmem>>, vector<1x16xf32>,
    } else {
    }
    %3 = arith.index_cast %arg0 : i32 to index
    %4 = memref.load %arg2[%3] : memref<2xi32, #tpu.memory_space<smem>>
    %5 = tpu.iota {dimensions = array<i32: 1>} : vector<1x16xi32>
    %c16_i32 = arith.constant 16 : i32
    %6 = arith.muli %arg1, %c16_i32 : i32
    %7 = vector.broadcast %6 : i32 to vector<1x16xi32>
    %8 = arith.addi %5, %7 : vector<1x16xi32>
    %9 = vector.broadcast %4 : i32 to vector<1x16xi32>
    %10 = arith.cmpi slt, %8, %9 : vector<1x16xi32>
    %11 = arith.extui %10 : vector<1x16xi1> to vector<1x16xi32>
    %12 = arith.sitofp %11 : vector<1x16xi32> to vector<1x16xf32>
    %c0 = arith.constant 0 : index
    %c0_1 = arith.constant 0 : index
    %c0_2 = arith.constant 0 : index
    %13 = vector.load %arg3[%c0, %c0_1, %c0_2] : memref<1x2x16xf32, #tpu.memory_space<vmem>>, vector<1x2x16xf32>
    %14 = vector.shape_cast %13 : vector<1x2x16xf32> to vector<2x16xf32>
    %15 = vector.broadcast %12 : vector<1x16xf32> to vector<2x16xf32>
    %16 = arith.mulf %14, %15 : vector<2x16xf32>
    %c0_3 = arith.constant 0 : index
    %c0_4 = arith.constant 0 : index
    %17 = vector.load %arg4[%c0_3, %c0_4] : memref<32x4xf32, #tpu.memory_space<vmem>>, vector<32x2xf32>
    %cst = arith.constant dense<0.000000e+00> : vector<32x16xf32>
    %18 = tpu.matmul %17, %16, %cst {dimension_numbers = #tpu.dot_dimension_numbers<[1], [0], [0], [1], [0, 0, 1, 1], [], []>} : vector<32x2xf32>, vector<2x16xf32>, vector<32x16xf32> -> vector<32x16xf32>
    %c0_5 = arith.constant 0 : index
    %c2 = arith.constant 2 : index
    %19 = vector.load %arg4[%c0_5, %c2] : memref<32x4xf32, #tpu.memory_space<vmem>>, vector<32x1xf32>
    %20 = vector.broadcast %19 : vector<32x1xf32> to vector<32x16xf32>
    %21 = vector.broadcast %12 : vector<1x16xf32> to vector<32x16xf32>
    %22 = arith.mulf %20, %21 : vector<32x16xf32>
    %23 = arith.addf %18, %22 : vector<32x16xf32>
    %c0_6 = arith.constant 0 : index
    %c3 = arith.constant 3 : index
    %24 = vector.load %arg4[%c0_6, %c3] : memref<32x4xf32, #tpu.memory_space<vmem>>, vector<32x1xf32>
    %25 = vector.broadcast %24 : vector<32x1xf32> to vector<32x16xf32>
    %26 = arith.addf %23, %25 : vector<32x16xf32>
    %cst_7 = arith.constant 0.000000e+00 : f32
    %27 = vector.broadcast %cst_7 : f32 to vector<32x16xf32>
    %28 = arith.maximumf %26, %27 : vector<32x16xf32>
    %c0_8 = arith.constant 0 : index
    %c0_9 = arith.constant 0 : index
    %29 = vector.load %arg5[%c0_8, %c0_9] : memref<32x33xf32, #tpu.memory_space<vmem>>, vector<32x32xf32>
    %cst_10 = arith.constant dense<0.000000e+00> : vector<32x16xf32>
    %30 = tpu.matmul %29, %28, %cst_10 {dimension_numbers = #tpu.dot_dimension_numbers<[1], [0], [0], [1], [0, 0, 1, 1], [], []>} : vector<32x32xf32>, vector<32x16xf32>, vector<32x16xf32> -> vector<32x16xf32>
    %c0_11 = arith.constant 0 : index
    %c32 = arith.constant 32 : index
    %31 = vector.load %arg5[%c0_11, %c32] : memref<32x33xf32, #tpu.memory_space<vmem>>, vector<32x1xf32>
    %32 = vector.broadcast %31 : vector<32x1xf32> to vector<32x16xf32>
    %33 = arith.addf %30, %32 : vector<32x16xf32>
    %cst_12 = arith.constant 0.000000e+00 : f32
    %34 = vector.broadcast %cst_12 : f32 to vector<32x16xf32>
    %35 = arith.maximumf %33, %34 : vector<32x16xf32>
    %c0_13 = arith.constant 0 : index
    %c0_14 = arith.constant 0 : index
    %36 = vector.load %arg6[%c0_13, %c0_14] : memref<16x33xf32, #tpu.memory_space<vmem>>, vector<16x32xf32>
    %cst_15 = arith.constant dense<0.000000e+00> : vector<16x16xf32>
    %37 = tpu.matmul %36, %35, %cst_15 {dimension_numbers = #tpu.dot_dimension_numbers<[1], [0], [0], [1], [0, 0, 1, 1], [], []>} : vector<16x32xf32>, vector<32x16xf32>, vector<16x16xf32> -> vector<16x16xf32>
    %c0_16 = arith.constant 0 : index
    %c32_17 = arith.constant 32 : index
    %38 = vector.load %arg6[%c0_16, %c32_17] : memref<16x33xf32, #tpu.memory_space<vmem>>, vector<16x1xf32>
    %39 = vector.broadcast %38 : vector<16x1xf32> to vector<16x16xf32>
    %40 = arith.addf %37, %39 : vector<16x16xf32>
    %c0_18 = arith.constant 0 : index
    %c0_19 = arith.constant 0 : index
    %41 = vector.load %arg11[%c0_18, %c0_19] : memref<1x16xf32, #tpu.memory_space<vmem>>, vector<1x16xf32>
    %cst_20 = arith.constant dense<0.000000e+00> : vector<1x16xf32>
    %42 = tpu.matmul %12, %40, %cst_20 {dimension_numbers = #tpu.dot_dimension_numbers<[1], [1], [0], [0], [0, 0, 1, 0], [], []>} : vector<1x16xf32>, vector<16x16xf32>, vector<1x16xf32> -> vector<1x16xf32>
    %43 = arith.addf %41, %42 : vector<1x16xf32>
    %c0_21 = arith.constant 0 : index
    %c0_22 = arith.constant 0 : index
    %44 = vector.load %arg11[%c0_21, %c0_22] : memref<1x16xf32, #tpu.memory_space<vmem>>, vector<1x16xf32>
    tpu.vector_store %arg11[%c0_21, %c0_22], %43 {strides = array<i32>} : memref<1x16xf32, #tpu.memory_space<vmem>>, vector<1x16xf32>,
    %c0_i32_23 = arith.constant 0 : i32
    %45 = arith.cmpi eq, %arg1, %c0_i32_23 : i32
    %46 = arith.extui %45 : i1 to i32
    %c0_i32_24 = arith.constant 0 : i32
    %47 = arith.cmpi ne, %46, %c0_i32_24 : i32
    scf.if %47 {
      %c0_25 = arith.constant 0 : index
      %c0_26 = arith.constant 0 : index
      %48 = vector.load %arg11[%c0_25, %c0_26] : memref<1x16xf32, #tpu.memory_space<vmem>>, vector<1x16xf32>
      %c0_27 = arith.constant 0 : index
      %c0_28 = arith.constant 0 : index
      %49 = vector.load %arg7[%c0_27, %c0_28] : memref<17x32xf32, #tpu.memory_space<vmem>>, vector<16x32xf32>
      %cst_29 = arith.constant dense<0.000000e+00> : vector<1x32xf32>
      %50 = tpu.matmul %48, %49, %cst_29 {dimension_numbers = #tpu.dot_dimension_numbers<[1], [0], [0], [1], [0, 0, 1, 1], [], []>} : vector<1x16xf32>, vector<16x32xf32>, vector<1x32xf32> -> vector<1x32xf32>
      %c16 = arith.constant 16 : index
      %c0_30 = arith.constant 0 : index
      %51 = vector.load %arg7[%c16, %c0_30] : memref<17x32xf32, #tpu.memory_space<vmem>>, vector<1x32xf32>
      %52 = arith.addf %50, %51 : vector<1x32xf32>
      %cst_31 = arith.constant 0.000000e+00 : f32
      %53 = vector.broadcast %cst_31 : f32 to vector<1x32xf32>
      %54 = arith.maximumf %52, %53 : vector<1x32xf32>
      %c0_32 = arith.constant 0 : index
      %c0_33 = arith.constant 0 : index
      %55 = vector.load %arg8[%c0_32, %c0_33] : memref<33x32xf32, #tpu.memory_space<vmem>>, vector<32x32xf32>
      %cst_34 = arith.constant dense<0.000000e+00> : vector<1x32xf32>
      %56 = tpu.matmul %54, %55, %cst_34 {dimension_numbers = #tpu.dot_dimension_numbers<[1], [0], [0], [1], [0, 0, 1, 1], [], []>} : vector<1x32xf32>, vector<32x32xf32>, vector<1x32xf32> -> vector<1x32xf32>
      %c32_35 = arith.constant 32 : index
      %c0_36 = arith.constant 0 : index
      %57 = vector.load %arg8[%c32_35, %c0_36] : memref<33x32xf32, #tpu.memory_space<vmem>>, vector<1x32xf32>
      %58 = arith.addf %56, %57 : vector<1x32xf32>
      %cst_37 = arith.constant 0.000000e+00 : f32
      %59 = vector.broadcast %cst_37 : f32 to vector<1x32xf32>
      %60 = arith.maximumf %58, %59 : vector<1x32xf32>
      %c0_38 = arith.constant 0 : index
      %c0_39 = arith.constant 0 : index
      %61 = vector.load %arg9[%c0_38, %c0_39] : memref<33x32xf32, #tpu.memory_space<vmem>>, vector<32x32xf32>
      %cst_40 = arith.constant dense<0.000000e+00> : vector<1x32xf32>
      %62 = tpu.matmul %60, %61, %cst_40 {dimension_numbers = #tpu.dot_dimension_numbers<[1], [0], [0], [1], [0, 0, 1, 1], [], []>} : vector<1x32xf32>, vector<32x32xf32>, vector<1x32xf32> -> vector<1x32xf32>
      %c32_41 = arith.constant 32 : index
      %c0_42 = arith.constant 0 : index
      %63 = vector.load %arg9[%c32_41, %c0_42] : memref<33x32xf32, #tpu.memory_space<vmem>>, vector<1x32xf32>
      %64 = arith.addf %62, %63 : vector<1x32xf32>
      %c0_43 = arith.constant 0 : index
      %c0_44 = arith.constant 0 : index
      %c0_45 = arith.constant 0 : index
      %65 = vector.load %arg10[%c0_43, %c0_44, %c0_45] : memref<1x1x32xf32, #tpu.memory_space<vmem>>, vector<1x1x32xf32>
      %66 = vector.shape_cast %65 : vector<1x1x32xf32> to vector<1x32xf32>
      %67 = vector.shape_cast %64 : vector<1x32xf32> to vector<1x1x32xf32>
      tpu.vector_store %arg10[%c0_43, %c0_44, %c0_45], %67 {strides = array<i32>} : memref<1x1x32xf32, #tpu.memory_space<vmem>>, vector<1x1x32xf32>,
    } else {
    }
    return
  }
  func.func @transform_0(%arg0: i32, %arg1: i32, %arg2: memref<2xi32, #tpu.memory_space<smem>>) -> (i32, i32, i32) {
    %c0_i32 = arith.constant 0 : i32
    %c0_i32_0 = arith.constant 0 : i32
    return %arg0, %c0_i32, %arg1 : i32, i32, i32
  }
  func.func @transform_1(%arg0: i32, %arg1: i32, %arg2: memref<2xi32, #tpu.memory_space<smem>>) -> (i32, i32) {
    %c0_i32 = arith.constant 0 : i32
    %c0_i32_0 = arith.constant 0 : i32
    %c0_i32_1 = arith.constant 0 : i32
    return %c0_i32, %c0_i32_0 : i32, i32
  }
  func.func @transform_2(%arg0: i32, %arg1: i32, %arg2: memref<2xi32, #tpu.memory_space<smem>>) -> (i32, i32) {
    %c0_i32 = arith.constant 0 : i32
    %c0_i32_0 = arith.constant 0 : i32
    %c0_i32_1 = arith.constant 0 : i32
    return %c0_i32, %c0_i32_0 : i32, i32
  }
  func.func @transform_3(%arg0: i32, %arg1: i32, %arg2: memref<2xi32, #tpu.memory_space<smem>>) -> (i32, i32) {
    %c0_i32 = arith.constant 0 : i32
    %c0_i32_0 = arith.constant 0 : i32
    %c0_i32_1 = arith.constant 0 : i32
    return %c0_i32, %c0_i32_0 : i32, i32
  }
  func.func @transform_4(%arg0: i32, %arg1: i32, %arg2: memref<2xi32, #tpu.memory_space<smem>>) -> (i32, i32) {
    %c0_i32 = arith.constant 0 : i32
    %c0_i32_0 = arith.constant 0 : i32
    %c0_i32_1 = arith.constant 0 : i32
    return %c0_i32, %c0_i32_0 : i32, i32
  }
  func.func @transform_5(%arg0: i32, %arg1: i32, %arg2: memref<2xi32, #tpu.memory_space<smem>>) -> (i32, i32) {
    %c0_i32 = arith.constant 0 : i32
    %c0_i32_0 = arith.constant 0 : i32
    %c0_i32_1 = arith.constant 0 : i32
    return %c0_i32, %c0_i32_0 : i32, i32
  }
  func.func @transform_6(%arg0: i32, %arg1: i32, %arg2: memref<2xi32, #tpu.memory_space<smem>>) -> (i32, i32) {
    %c0_i32 = arith.constant 0 : i32
    %c0_i32_0 = arith.constant 0 : i32
    %c0_i32_1 = arith.constant 0 : i32
    return %c0_i32, %c0_i32_0 : i32, i32
  }
  func.func @transform_7(%arg0: i32, %arg1: i32, %arg2: memref<2xi32, #tpu.memory_space<smem>>) -> (i32, i32, i32) {
    %c0_i32 = arith.constant 0 : i32
    %c0_i32_0 = arith.constant 0 : i32
    %c0_i32_1 = arith.constant 0 : i32
    return %arg0, %c0_i32, %c0_i32_0 : i32, i32, i32
  }
}

</mosaic_0001>

<llo_original>
// kernel: tpu_custom_call.1
$region0: #{tpu_custom_call.1}
  #allocation0 [shape = 'u32[]', space=smem, size = 0x4, offset = 0x4, fixed_abs, tag = 'smem constant byte address 0x4 - core index']
  #allocation1 [shape = 'u32[144,128]{1,0:T(1,128)}', space=vmem, size = 0x12000, scoped, tag = 'internal scratch']
  #allocation2 [shape = 'f32[1,16]{1,0:T(1,128)}', space=vmem, size = 0x200, scoped, tag = 'scratch operand']
  #allocation3 [shape = 's32[1]{0}', space=sflag, size = 0x4, scoped, tag = 'scoped memory for tpu_custom_call.1']
  #allocation4 [shape = 'u8[512]{0}', space=smem, size = 0x200, scoped, tag = 'prefetched SMEM operand 0']
  %s0 = inlined_call_operand.vmem [shape: s32[2], index: 0, kind: input, shape index: {}]
  %s1 = inlined_call_operand.vmem [shape: f32[2,2,16], index: 1, kind: input, shape index: {}]
  %s2 = inlined_call_operand.vmem [shape: f32[32,4], index: 2, kind: input, shape index: {}]
  %s3 = inlined_call_operand.vmem [shape: f32[32,33], index: 3, kind: input, shape index: {}]
  %s4 = inlined_call_operand.vmem [shape: f32[16,33], index: 4, kind: input, shape index: {}]
  %s5 = inlined_call_operand.vmem [shape: f32[17,32], index: 5, kind: input, shape index: {}]
  %s6 = inlined_call_operand.vmem [shape: f32[33,32], index: 6, kind: input, shape index: {}]
  %s7 = inlined_call_operand.vmem [shape: f32[33,32], index: 7, kind: input, shape index: {}]
  %s8 = inlined_call_operand.hbm [shape: f32[2,1,32], index: 8, kind: output, shape index: {}]
  %s9 = sld [smem:[#allocation0]]
  $region69: #{tpu_custom_call.1} parent=0
    _
  %s11 = ssub.s32 1, %s9
  %s12 = scalar_select 0, %s11, %s9
  %s13 = sshll.u32 %s0, 4
  %s14 = int_to_ptr.vmem [resolvable:$true] %s13
  %16 = dma.vmem_to_smem %s14, 16, [#allocation4], [#allocation3]
  %17 = dma.done [#allocation3], 16
  %18 = sfence
  $region1: #{tpu_custom_call.1} parent=0
    #allocation5 [shape = 'u8[1024]{0}', space=vmem, size = 0x400, scoped, tag = 'output window, operand 0']
    #allocation6 [shape = 's32[2]{0}', space=sflag, size = 0x8, scoped, tag = 'scoped memory for tpu_custom_call.1']
    %19 = vsyncpa [#allocation6], 0
    %s20 = scalar_lea.sflag [#allocation6], 1
    %21 = vsyncpa %s20, 0
    loop: start=0, step=1, limit=4
    $region2: #{tpu_custom_call.1} parent=1 // loop_pre_header
      _
    $region3: #{tpu_custom_call.1} parent=1 // loop_header
      %s23 = sphi 0, %s27
      %p24 = scmp.ge.s32.totalorder %s23, 4
      %s30 = sphi 0, %s42
      %s31 = sphi 0, %s38
      %s32 = sphi 0, %s30
      %s33 = sphi 0, %s31
      %s34 = sphi 0, %s32
      %s35 = sphi 0, %s33
      %s47 = sphi 0, %s49
      %s50 = sphi 0, %s47
      %s51 = sphi 0, %s50
      %s67 = sphi 0, %s51
      %s71 = sphi 0, %s71
      %s73 = sphi 0, %s71
      %s74 = sphi 0, %s73
      %s88 = sphi 0, %s74
      %s92 = sphi 0, %s92
      %s94 = sphi 0, %s92
      %s95 = sphi 0, %s94
      %s109 = sphi 0, %s95
      %s113 = sphi 0, %s113
      %s115 = sphi 0, %s113
      %s116 = sphi 0, %s115
      %s130 = sphi 0, %s116
      %s134 = sphi 0, %s134
      %s136 = sphi 0, %s134
      %s137 = sphi 0, %s136
      %s151 = sphi 0, %s137
      %s155 = sphi 0, %s155
      %s157 = sphi 0, %s155
      %s158 = sphi 0, %s157
      %s172 = sphi 0, %s158
      %s176 = sphi 0, %s176
      %s178 = sphi 0, %s176
      %s179 = sphi 0, %s178
      %s193 = sphi 0, %s179
      %s199 = sphi 0, %s201
      %s202 = sphi 0, %s199
      %s203 = sphi 0, %s202
      %s219 = sphi 0, %s203
    $region4: #{tpu_custom_call.1} parent=1 // loop_header_branch
      %26 = sbr.rel (%p24) target = $region8
    $region5: #{tpu_custom_call.1} parent=1 // loop_body
      %s28 = ssub.s32 %s23, 1
      %s29 = ssub.s32 %s23, 2
      %s36 = sadd.s32 1, %s31
      %p37 = scmp.ge.s32.totalorder %s36, 1
      %s38 = scalar_select %p37, 0, %s36
      %s39 = sadd.s32 1, %s30
      %s40 = scalar_select %p37, %s39, %s30
      %p41 = scmp.ge.s32.totalorder %s40, 2
      %s42 = scalar_select %p41, 0, %s40
      %s43 = ssub.s32 %s30, %s42
      %s44 = ssub.s32 %s31, %s38
      %s45 = sor.u32 %s43, %s44
      %p46 = scmp.eq.s32.totalorder %s45, 0
      %s48 = sadd.s32 %s47, 1
      %s49 = scalar_select %p46, %s47, %s48
      %p52 = pneg %p46
      %p53 = scmp.eq.s32.totalorder %s23, 1
      %p54 = por %p52, %p53
      %p55 = scmp.ne.s32.totalorder %s47, %s50
      %p56 = scmp.eq.s32.totalorder %s23, 0
      %p57 = por %p55, %p56
      %p58 = scmp.ne.s32.totalorder %s47, %s50
      %p59 = scmp.eq.s32.totalorder %s28, 1
      %p60 = por %p58, %p59
      %p61 = scmp.ne.s32.totalorder %s50, %s51
      %p62 = scmp.eq.s32.totalorder %s28, 0
      %p63 = por %p61, %p62
      %p64 = scmp.ne.s32.totalorder %s50, %s51
      %p65 = scmp.eq.s32.totalorder %s29, 1
      %p66 = por %p64, %p65
      %p68 = scmp.ne.s32.totalorder %s51, %s67
      %p69 = scmp.eq.s32.totalorder %s29, 0
      %p70 = por %p68, %p69
      %s72 = sadd.s32 %s71, 1
      %p75 = scmp.eq.s32.totalorder %s23, 1
      %p76 = scmp.ne.s32.totalorder %s71, %s73
      %p77 = scmp.eq.s32.totalorder %s23, 0
      %p78 = por %p76, %p77
      %p79 = scmp.ne.s32.totalorder %s71, %s73
      %p80 = scmp.eq.s32.totalorder %s28, 1
      %p81 = por %p79, %p80
      %p82 = scmp.ne.s32.totalorder %s73, %s74
      %p83 = scmp.eq.s32.totalorder %s28, 0
      %p84 = por %p82, %p83
      %p85 = scmp.ne.s32.totalorder %s73, %s74
      %p86 = scmp.eq.s32.totalorder %s29, 1
      %p87 = por %p85, %p86
      %p89 = scmp.ne.s32.totalorder %s74, %s88
      %p90 = scmp.eq.s32.totalorder %s29, 0
      %p91 = por %p89, %p90
      %s93 = sadd.s32 %s92, 1
      %p96 = scmp.eq.s32.totalorder %s23, 1
      %p97 = scmp.ne.s32.totalorder %s92, %s94
      %p98 = scmp.eq.s32.totalorder %s23, 0
      %p99 = por %p97, %p98
      %p100 = scmp.ne.s32.totalorder %s92, %s94
      %p101 = scmp.eq.s32.totalorder %s28, 1
      %p102 = por %p100, %p101
      %p103 = scmp.ne.s32.totalorder %s94, %s95
      %p104 = scmp.eq.s32.totalorder %s28, 0
      %p105 = por %p103, %p104
      %p106 = scmp.ne.s32.totalorder %s94, %s95
      %p107 = scmp.eq.s32.totalorder %s29, 1
      %p108 = por %p106, %p107
      %p110 = scmp.ne.s32.totalorder %s95, %s109
      %p111 = scmp.eq.s32.totalorder %s29, 0
      %p112 = por %p110, %p111
      %s114 = sadd.s32 %s113, 1
      %p117 = scmp.eq.s32.totalorder %s23, 1
      %p118 = scmp.ne.s32.totalorder %s113, %s115
      %p119 = scmp.eq.s32.totalorder %s23, 0
      %p120 = por %p118, %p119
      %p121 = scmp.ne.s32.totalorder %s113, %s115
      %p122 = scmp.eq.s32.totalorder %s28, 1
      %p123 = por %p121, %p122
      %p124 = scmp.ne.s32.totalorder %s115, %s116
      %p125 = scmp.eq.s32.totalorder %s28, 0
      %p126 = por %p124, %p125
      %p127 = scmp.ne.s32.totalorder %s115, %s116
      %p128 = scmp.eq.s32.totalorder %s29, 1
      %p129 = por %p127, %p128
      %p131 = scmp.ne.s32.totalorder %s116, %s130
      %p132 = scmp.eq.s32.totalorder %s29, 0
      %p133 = por %p131, %p132
      %s135 = sadd.s32 %s134, 1
      %p138 = scmp.eq.s32.totalorder %s23, 1
      %p139 = scmp.ne.s32.totalorder %s134, %s136
      %p140 = scmp.eq.s32.totalorder %s23, 0
      %p141 = por %p139, %p140
      %p142 = scmp.ne.s32.totalorder %s134, %s136
      %p143 = scmp.eq.s32.totalorder %s28, 1
      %p144 = por %p142, %p143
      %p145 = scmp.ne.s32.totalorder %s136, %s137
      %p146 = scmp.eq.s32.totalorder %s28, 0
      %p147 = por %p145, %p146
      %p148 = scmp.ne.s32.totalorder %s136, %s137
      %p149 = scmp.eq.s32.totalorder %s29, 1
      %p150 = por %p148, %p149
      %p152 = scmp.ne.s32.totalorder %s137, %s151
      %p153 = scmp.eq.s32.totalorder %s29, 0
      %p154 = por %p152, %p153
      %s156 = sadd.s32 %s155, 1
      %p159 = scmp.eq.s32.totalorder %s23, 1
      %p160 = scmp.ne.s32.totalorder %s155, %s157
      %p161 = scmp.eq.s32.totalorder %s23, 0
      %p162 = por %p160, %p161
      %p163 = scmp.ne.s32.totalorder %s155, %s157
      %p164 = scmp.eq.s32.totalorder %s28, 1
      %p165 = por %p163, %p164
      %p166 = scmp.ne.s32.totalorder %s157, %s158
      %p167 = scmp.eq.s32.totalorder %s28, 0
      %p168 = por %p166, %p167
      %p169 = scmp.ne.s32.totalorder %s157, %s158
      %p170 = scmp.eq.s32.totalorder %s29, 1
      %p171 = por %p169, %p170
      %p173 = scmp.ne.s32.totalorder %s158, %s172
      %p174 = scmp.eq.s32.totalorder %s29, 0
      %p175 = por %p173, %p174
      %s177 = sadd.s32 %s176, 1
      %p180 = scmp.eq.s32.totalorder %s23, 1
      %p181 = scmp.ne.s32.totalorder %s176, %s178
      %p182 = scmp.eq.s32.totalorder %s23, 0
      %p183 = por %p181, %p182
      %p184 = scmp.ne.s32.totalorder %s176, %s178
      %p185 = scmp.eq.s32.totalorder %s28, 1
      %p186 = por %p184, %p185
      %p187 = scmp.ne.s32.totalorder %s178, %s179
      %p188 = scmp.eq.s32.totalorder %s28, 0
      %p189 = por %p187, %p188
      %p190 = scmp.ne.s32.totalorder %s178, %s179
      %p191 = scmp.eq.s32.totalorder %s29, 1
      %p192 = por %p190, %p191
      %p194 = scmp.ne.s32.totalorder %s179, %s193
      %p195 = scmp.eq.s32.totalorder %s29, 0
      %p196 = por %p194, %p195
      %s197 = ssub.s32 %s30, %s42
      %p198 = scmp.eq.s32.totalorder %s197, 0
      %s200 = sadd.s32 %s199, 1
      %s201 = scalar_select %p198, %s199, %s200
      %p204 = pneg %p198
      %p205 = scmp.eq.s32.totalorder %s23, 1
      %p206 = por %p204, %p205
      %p207 = scmp.ne.s32.totalorder %s199, %s202
      %p208 = scmp.eq.s32.totalorder %s23, 0
      %p209 = por %p207, %p208
      %p210 = scmp.ne.s32.totalorder %s199, %s202
      %p211 = scmp.eq.s32.totalorder %s28, 1
      %p212 = por %p210, %p211
      %p213 = scmp.ne.s32.totalorder %s202, %s203
      %p214 = scmp.eq.s32.totalorder %s28, 0
      %p215 = por %p213, %p214
      %p216 = scmp.ne.s32.totalorder %s202, %s203
      %p217 = scmp.eq.s32.totalorder %s29, 1
      %p218 = por %p216, %p217
      %p220 = scmp.ne.s32.totalorder %s203, %s219
      %p221 = scmp.eq.s32.totalorder %s29, 0
      %p222 = por %p220, %p221
      %p223 = scmp.le.s32.totalorder 1, %s23
      %p224 = scmp.lt.s32.totalorder %s23, 3
      %p225 = pnand %p223, %p224
      %p226 = pneg %p225
      // Predicated region
      $region9: #{tpu_custom_call.1} parent=5 // pred_check
        _
      $region10: #{tpu_custom_call.1} parent=5 // pred_check_branch
        %228 = sbr.rel (%p225) target = $region12
      $region11: #{tpu_custom_call.1} parent=5 // pred_region
        %s229 = ssub.s32 %s23, 1
        // Predicated region
        $region13: #{tpu_custom_call.1} parent=11 // pred_check
          %p230 = pneg %p84
        $region14: #{tpu_custom_call.1} parent=11 // pred_check_branch
          %232 = sbr.rel (%p230) target = $region16
        $region15: #{tpu_custom_call.1} parent=11 // pred_region
          _
        $region16: #{tpu_custom_call.1} parent=11 // pred_fallthru
          _
        // Predicated region
        $region17: #{tpu_custom_call.1} parent=11 // pred_check
          %p233 = pneg %p105
        $region18: #{tpu_custom_call.1} parent=11 // pred_check_branch
          %235 = sbr.rel (%p233) target = $region20
        $region19: #{tpu_custom_call.1} parent=11 // pred_region
          _
        $region20: #{tpu_custom_call.1} parent=11 // pred_fallthru
          _
        // Predicated region
        $region21: #{tpu_custom_call.1} parent=11 // pred_check
          %p236 = pneg %p126
        $region22: #{tpu_custom_call.1} parent=11 // pred_check_branch
          %238 = sbr.rel (%p236) target = $region24
        $region23: #{tpu_custom_call.1} parent=11 // pred_region
          _
        $region24: #{tpu_custom_call.1} parent=11 // pred_fallthru
          _
        // Predicated region
        $region25: #{tpu_custom_call.1} parent=11 // pred_check
          %p239 = pneg %p147
        $region26: #{tpu_custom_call.1} parent=11 // pred_check_branch
          %241 = sbr.rel (%p239) target = $region28
        $region27: #{tpu_custom_call.1} parent=11 // pred_region
          _
        $region28: #{tpu_custom_call.1} parent=11 // pred_fallthru
          _
        // Predicated region
        $region29: #{tpu_custom_call.1} parent=11 // pred_check
          %p242 = pneg %p168
        $region30: #{tpu_custom_call.1} parent=11 // pred_check_branch
          %244 = sbr.rel (%p242) target = $region32
        $region31: #{tpu_custom_call.1} parent=11 // pred_region
          _
        $region32: #{tpu_custom_call.1} parent=11 // pred_fallthru
          _
        // Predicated region
        $region33: #{tpu_custom_call.1} parent=11 // pred_check
          %p245 = pneg %p189
        $region34: #{tpu_custom_call.1} parent=11 // pred_check_branch
          %247 = sbr.rel (%p245) target = $region36
        $region35: #{tpu_custom_call.1} parent=11 // pred_region
          _
        $region36: #{tpu_custom_call.1} parent=11 // pred_fallthru
          _
      $region12: #{tpu_custom_call.1} parent=5 // pred_fallthru
        _
      %p248 = scmp.lt.s32.totalorder %s23, 2
      // Predicated region
      $region37: #{tpu_custom_call.1} parent=5 // pred_check
        %p249 = pneg %p248
      $region38: #{tpu_custom_call.1} parent=5 // pred_check_branch
        %251 = sbr.rel (%p249) target = $region40
      $region39: #{tpu_custom_call.1} parent=5 // pred_region
        // Predicated region
        $region41: #{tpu_custom_call.1} parent=39 // pred_check
          %p252 = pneg %p57
        $region42: #{tpu_custom_call.1} parent=39 // pred_check_branch
          %254 = sbr.rel (%p252) target = $region44
        $region43: #{tpu_custom_call.1} parent=39 // pred_region
          %p255 = scmp.lt.s32.totalorder %s30, 1
          %s256 = scalar_select %p255, %s30, 1
          %p257 = scmp.lt.s32.totalorder %s31, 0
          %s258 = scalar_select %p257, %s31, 0
          %s259 = sadd.s32 %s258, %s256
          %s260 = smul.addr %s259, 2
          %s261 = scalar_lea.vmem %s1, %s260
        $region44: #{tpu_custom_call.1} parent=39 // pred_fallthru
          _
      $region40: #{tpu_custom_call.1} parent=5 // pred_fallthru
        _
      %p262 = scmp.le.s32.totalorder 1, %s23
      %p263 = scmp.lt.s32.totalorder %s23, 3
      %p264 = pnand %p262, %p263
      %p265 = pneg %p264
      // Predicated region
      $region45: #{tpu_custom_call.1} parent=5 // pred_check
        _
      $region46: #{tpu_custom_call.1} parent=5 // pred_check_branch
        %267 = sbr.rel (%p264) target = $region48
      $region47: #{tpu_custom_call.1} parent=5 // pred_region
        %s268 = ssub.s32 %s23, 1
        %p269 = scmp.lt.s32.totalorder %s32, 1
        %s270 = scalar_select %p269, %s32, 1
        %p271 = scmp.lt.s32.totalorder %s33, 0
        %s272 = scalar_select %p271, %s33, 0
        %s273 = sadd.s32 %s272, %s270
        %s274 = smul.addr %s273, 2
        %s275 = scalar_lea.vmem %s1, %s274
        %p276 = pneg %p63
        %p277 = pneg %p60
        %p278 = pneg %p84
        %p279 = pneg %p81
        %p280 = pneg %p105
        %p281 = pneg %p102
        %p282 = pneg %p126
        %p283 = pneg %p123
        %p284 = pneg %p147
        %p285 = pneg %p144
        %p286 = pneg %p168
        %p287 = pneg %p165
        %p288 = pneg %p189
        %p289 = pneg %p186
        %p290 = pneg %p215
        %p291 = pneg %p212
        %s292 = sand.u32 %s202, 1
        %s293 = scalar_lea.sflag [#allocation6], %s292
        %s294 = sand.u32 %s202, 1
        %s295 = scalar_lea.vmem [#allocation5], %s294
        %p296 = scmp.lt.s32.totalorder %s32, 1
        %s297 = scalar_select %p296, %s32, 1
        %p298 = scmp.lt.s32.totalorder %s33, 0
        %s299 = scalar_select %p298, %s33, 0
        %s300 = sadd.s32 %s299, %s297
        %s301 = smul.addr %s300, 2
        %s302 = scalar_lea.vmem %s1, %s301
        %p303 = scmp.eq.s32.totalorder %s33, 0
        // Predicated region
        $region49: #{tpu_custom_call.1} parent=47 // pred_check
          %p304 = pneg %p303
        $region50: #{tpu_custom_call.1} parent=47 // pred_check_branch
          %306 = sbr.rel (%p304) target = $region52
        $region51: #{tpu_custom_call.1} parent=47 // pred_region
          %vm307 = vcmask 122880
          %308 = vst.msk [vmem:[#allocation2] sm:$0x1] %vm307, 0.0
        $region52: #{tpu_custom_call.1} parent=47 // pred_fallthru
          _
        %s309 = sld [smem:[#allocation4 + %s32]]
        %v310 = vlaneseq
        %v311 = vand.u32 %v310, 127
        %s312 = smul.u32 %s33, 16
        %v313 = vstv %s312
        %v314 = vadd.s32 %v311, %v313
        %v315 = vstv %s309
        %vm316 = vcmp.lt.s32.totalorder %v314, %v315
        %v317 = vsel %vm316, 1, 0
        %v318 = vcvt.s32.f32 %v317
        %v319 = vld [vmem:[%s302] sm:$0x3]
        %v320 = vmul.f32 %v319, %v318
        %v321 = vld [vmem:[%s2] sm:$0xff]
        %v322 = vld [vmem:[%s2 + $0x8] sm:$0xff]
        %v323 = vld [vmem:[%s2 + $0x10] sm:$0xff]
        %v324 = vld [vmem:[%s2 + $0x18] sm:$0xff]
        %326 = vset.pattern.permute.xlu0 2
        %327 = vperm.xlu0 %326, %v321
        %v328 = vpop.permute.xlu0 %327
        %331 = vset.pattern.permute.xlu0 2
        %332 = vperm.xlu0 %331, %v322
        %v333 = vpop.permute.xlu0 %332
        %336 = vset.pattern.permute.xlu0 2
        %337 = vperm.xlu0 %336, %v323
        %v338 = vpop.permute.xlu0 %337
        %341 = vset.pattern.permute.xlu0 2
        %342 = vperm.xlu0 %341, %v324
        %v343 = vpop.permute.xlu0 %342
        %v345 = vmul.f32 %v328, %v318
        %v346 = vmul.f32 %v333, %v318
        %v347 = vmul.f32 %v338, %v318
        %v348 = vmul.f32 %v343, %v318
        %vm349 = vcmask 15360
        %v350 = vsel %vm349, %v321, 0
        %v352 = vsel %vm349, %v322, 0
        %v354 = vsel %vm349, %v323, 0
        %v356 = vsel %vm349, %v324, 0
        %vm358 = vcmask 1041408
        %v360 = vsel %vm358, %v320, 0
        %362 = vmatprep.subr.mxu0 0.0
        %363 = vmatpush1.msra.mxu0 0.0
        %364 = vmatprep.subr.mxu0 0.0
        %365 = vmatpush1.msra.mxu0 0.0
        %366 = vmatprep.subr.mxu0 0.0
        %367 = vmatpush1.msra.mxu0 0.0
        %368 = vmatprep.subr.mxu0 0.0
        %369 = vmatpush1.msra.mxu0 0.0
        %370 = vmatprep.subr.mxu0 0.0
        %371 = vmatpush1.msra.mxu0 0.0
        %372 = vmatprep.subr.mxu0 0.0
        %373 = vmatpush1.msra.mxu0 0.0
        %374 = vmatprep.subr.mxu0 0.0
        %375 = vmatpush1.msra.mxu0 0.0
        %376 = vmatprep.subr.mxu0 0.0
        %377 = vmatpush1.msra.mxu0 0.0
        %378 = vmatprep.subr.mxu0 0.0
        %379 = vmatpush1.msra.mxu0 0.0
        %380 = vmatprep.subr.mxu0 0.0
        %381 = vmatpush1.msra.mxu0 0.0
        %382 = vmatprep.subr.mxu0 0.0
        %383 = vmatpush1.msra.mxu0 0.0
        %384 = vmatprep.subr.mxu0 0.0
        %385 = vmatpush1.msra.mxu0 0.0
        %386 = vmatprep.subr.mxu0 0.0
        %387 = vmatpush1.msra.mxu0 0.0
        %388 = vmatprep.subr.mxu0 0.0
        %389 = vmatpush1.msra.mxu0 0.0
        %390 = vmatprep.subr.mxu0 0.0
        %391 = vmatpush1.msra.mxu0 0.0
        %392 = vmatprep.subr.mxu0 0.0
        %393 = vmatpush1.msra.mxu0 %v360
        %394 = vmatprep.subr.mxu0 0.0
        %395 = vmatpush2.msra.mxu0 0.0
        %396 = vmatprep.subr.mxu0 0.0
        %397 = vmatpush2.msra.mxu0 0.0
        %398 = vmatprep.subr.mxu0 0.0
        %399 = vmatpush2.msra.mxu0 0.0
        %400 = vmatprep.subr.mxu0 0.0
        %401 = vmatpush2.msra.mxu0 0.0
        %402 = vmatprep.subr.mxu0 0.0
        %403 = vmatpush2.msra.mxu0 0.0
        %404 = vmatprep.subr.mxu0 0.0
        %405 = vmatpush2.msra.mxu0 0.0
        %406 = vmatprep.subr.mxu0 0.0
        %407 = vmatpush2.msra.mxu0 0.0
        %408 = vmatprep.subr.mxu0 0.0
        %409 = vmatpush2.msra.mxu0 0.0
        %410 = vmatprep.subr.mxu0 0.0
        %411 = vmatpush2.msra.mxu0 0.0
        %412 = vmatprep.subr.mxu0 0.0
        %413 = vmatpush2.msra.mxu0 0.0
        %414 = vmatprep.subr.mxu0 0.0
        %415 = vmatpush2.msra.mxu0 0.0
        %416 = vmatprep.subr.mxu0 0.0
        %417 = vmatpush2.msra.mxu0 0.0
        %418 = vmatprep.subr.mxu0 0.0
        %419 = vmatpush2.msra.mxu0 0.0
        %420 = vmatprep.subr.mxu0 0.0
        %421 = vmatpush2.msra.mxu0 0.0
        %422 = vmatprep.subr.mxu0 0.0
        %423 = vmatpush2.msra.mxu0 0.0
        %424 = vmatprep.subr.mxu0 0.0
        %425 = vmatpush2.msra.mxu0 0.0
        %426 = vmatprep.mubr.f32.mxu0 0.0
        %427 = vmatmul.mubr.f32.gmra.mxu0 %v350
        %v428 = vpop.f32.mrf.mxu0
        %v429 = vadd.f32 %v345, %v428
        %v430 = vpop.f32.mrf.mxu0
        %431 = vmatprep.mubr.f32.mxu0 0.0
        %432 = vmatmul.mubr.f32.gmra.mxu0 %v352
        %v433 = vpop.f32.mrf.mxu0
        %v434 = vadd.f32 %v346, %v433
        %v435 = vpop.f32.mrf.mxu0
        %436 = vmatprep.mubr.f32.mxu0 0.0
        %437 = vmatmul.mubr.f32.gmra.mxu0 %v354
        %v438 = vpop.f32.mrf.mxu0
        %v439 = vadd.f32 %v347, %v438
        %v440 = vpop.f32.mrf.mxu0
        %441 = vmatprep.mubr.f32.mxu0 0.0
        %442 = vmatmul.mubr.f32.gmra.mxu0 %v356
        %v443 = vpop.f32.mrf.mxu0
        %v444 = vadd.f32 %v348, %v443
        %v445 = vpop.f32.mrf.mxu0
        %446 = vdwg.mxu0
        %447 = vset.pattern.permute.xlu0 3
        %448 = vperm.xlu0 %447, %v321
        %v449 = vpop.permute.xlu0 %448
        %451 = vset.pattern.permute.xlu0 3
        %452 = vperm.xlu0 %451, %v322
        %v453 = vpop.permute.xlu0 %452
        %455 = vset.pattern.permute.xlu0 3
        %456 = vperm.xlu0 %455, %v323
        %v457 = vpop.permute.xlu0 %456
        %459 = vset.pattern.permute.xlu0 3
        %460 = vperm.xlu0 %459, %v324
        %v461 = vpop.permute.xlu0 %460
        %v463 = vadd.f32 %v429, %v449
        %v464 = vadd.f32 %v434, %v453
        %v465 = vadd.f32 %v439, %v457
        %v466 = vadd.f32 %v444, %v461
        %v467 = vmax.f32 %v463, 0.0
        %v468 = vmax.f32 %v464, 0.0
        %v469 = vmax.f32 %v465, 0.0
        %v470 = vmax.f32 %v466, 0.0
        %v471 = vld [vmem:[%s3] sm:$0xff]
        %v472 = vld [vmem:[%s3 + $0x8] sm:$0xff]
        %v473 = vld [vmem:[%s3 + $0x10] sm:$0xff]
        %v474 = vld [vmem:[%s3 + $0x18] sm:$0xff]
        %476 = vset.pattern.permute.xlu0 32
        %477 = vperm.xlu0 %476, %v471
        %v478 = vpop.permute.xlu0 %477
        %481 = vset.pattern.permute.xlu0 32
        %482 = vperm.xlu0 %481, %v472
        %v483 = vpop.permute.xlu0 %482
        %486 = vset.pattern.permute.xlu0 32
        %487 = vperm.xlu0 %486, %v473
        %v488 = vpop.permute.xlu0 %487
        %491 = vset.pattern.permute.xlu0 32
        %492 = vperm.xlu0 %491, %v474
        %v493 = vpop.permute.xlu0 %492
        %vm495 = vcmask 261120
        %v496 = vsel %vm495, %v471, 0
        %v498 = vsel %vm495, %v472, 0
        %v500 = vsel %vm495, %v473, 0
        %v502 = vsel %vm495, %v474, 0
        %504 = vmatprep.subr.mxu0 0.0
        %505 = vmatpush1.msra.mxu0 0.0
        %506 = vmatprep.subr.mxu0 0.0
        %507 = vmatpush1.msra.mxu0 0.0
        %508 = vmatprep.subr.mxu0 0.0
        %509 = vmatpush1.msra.mxu0 0.0
        %510 = vmatprep.subr.mxu0 0.0
        %511 = vmatpush1.msra.mxu0 0.0
        %512 = vmatprep.subr.mxu0 0.0
        %513 = vmatpush1.msra.mxu0 0.0
        %514 = vmatprep.subr.mxu0 0.0
        %515 = vmatpush1.msra.mxu0 0.0
        %516 = vmatprep.subr.mxu0 0.0
        %517 = vmatpush1.msra.mxu0 0.0
        %518 = vmatprep.subr.mxu0 0.0
        %519 = vmatpush1.msra.mxu0 0.0
        %520 = vmatprep.subr.mxu0 0.0
        %521 = vmatpush1.msra.mxu0 0.0
        %522 = vmatprep.subr.mxu0 0.0
        %523 = vmatpush1.msra.mxu0 0.0
        %524 = vmatprep.subr.mxu0 0.0
        %525 = vmatpush1.msra.mxu0 0.0
        %526 = vmatprep.subr.mxu0 0.0
        %527 = vmatpush1.msra.mxu0 0.0
        %528 = vmatprep.subr.mxu0 0.0
        %529 = vmatpush1.msra.mxu0 %v470
        %530 = vmatprep.subr.mxu0 0.0
        %531 = vmatpush1.msra.mxu0 %v469
        %532 = vmatprep.subr.mxu0 0.0
        %533 = vmatpush1.msra.mxu0 %v468
        %534 = vmatprep.subr.mxu0 0.0
        %535 = vmatpush1.msra.mxu0 %v467
        %536 = vmatprep.subr.mxu0 0.0
        %537 = vmatpush2.msra.mxu0 0.0
        %538 = vmatprep.subr.mxu0 0.0
        %539 = vmatpush2.msra.mxu0 0.0
        %540 = vmatprep.subr.mxu0 0.0
        %541 = vmatpush2.msra.mxu0 0.0
        %542 = vmatprep.subr.mxu0 0.0
        %543 = vmatpush2.msra.mxu0 0.0
        %544 = vmatprep.subr.mxu0 0.0
        %545 = vmatpush2.msra.mxu0 0.0
        %546 = vmatprep.subr.mxu0 0.0
        %547 = vmatpush2.msra.mxu0 0.0
        %548 = vmatprep.subr.mxu0 0.0
        %549 = vmatpush2.msra.mxu0 0.0
        %550 = vmatprep.subr.mxu0 0.0
        %551 = vmatpush2.msra.mxu0 0.0
        %552 = vmatprep.subr.mxu0 0.0
        %553 = vmatpush2.msra.mxu0 0.0
        %554 = vmatprep.subr.mxu0 0.0
        %555 = vmatpush2.msra.mxu0 0.0
        %556 = vmatprep.subr.mxu0 0.0
        %557 = vmatpush2.msra.mxu0 0.0
        %558 = vmatprep.subr.mxu0 0.0
        %559 = vmatpush2.msra.mxu0 0.0
        %560 = vmatprep.subr.mxu0 0.0
        %561 = vmatpush2.msra.mxu0 0.0
        %562 = vmatprep.subr.mxu0 0.0
        %563 = vmatpush2.msra.mxu0 0.0
        %564 = vmatprep.subr.mxu0 0.0
        %565 = vmatpush2.msra.mxu0 0.0
        %566 = vmatprep.subr.mxu0 0.0
        %567 = vmatpush2.msra.mxu0 0.0
        %568 = vmatprep.mubr.f32.mxu0 0.0
        %569 = vmatmul.mubr.f32.gmra.mxu0 %v496
        %v570 = vpop.f32.mrf.mxu0
        %v571 = vadd.f32 %v478, %v570
        %v572 = vpop.f32.mrf.mxu0
        %573 = vmatprep.mubr.f32.mxu0 0.0
        %574 = vmatmul.mubr.f32.gmra.mxu0 %v498
        %v575 = vpop.f32.mrf.mxu0
        %v576 = vadd.f32 %v483, %v575
        %v577 = vpop.f32.mrf.mxu0
        %578 = vmatprep.mubr.f32.mxu0 0.0
        %579 = vmatmul.mubr.f32.gmra.mxu0 %v500
        %v580 = vpop.f32.mrf.mxu0
        %v581 = vadd.f32 %v488, %v580
        %v582 = vpop.f32.mrf.mxu0
        %583 = vmatprep.mubr.f32.mxu0 0.0
        %584 = vmatmul.mubr.f32.gmra.mxu0 %v502
        %v585 = vpop.f32.mrf.mxu0
        %v586 = vadd.f32 %v493, %v585
        %v587 = vpop.f32.mrf.mxu0
        %588 = vdwg.mxu0
        %v589 = vmax.f32 %v571, 0.0
        %v590 = vmax.f32 %v576, 0.0
        %v591 = vmax.f32 %v581, 0.0
        %v592 = vmax.f32 %v586, 0.0
        %v593 = vld [vmem:[%s4] sm:$0xff]
        %v594 = vld [vmem:[%s4 + $0x8] sm:$0xff]
        %596 = vset.pattern.permute.xlu0 32
        %597 = vperm.xlu0 %596, %v593
        %v598 = vpop.permute.xlu0 %597
        %601 = vset.pattern.permute.xlu0 32
        %602 = vperm.xlu0 %601, %v594
        %v603 = vpop.permute.xlu0 %602
        %v605 = vsel %vm495, %v593, 0
        %v607 = vsel %vm495, %v594, 0
        %609 = vmatprep.subr.mxu0 0.0
        %610 = vmatpush1.msra.mxu0 0.0
        %611 = vmatprep.subr.mxu0 0.0
        %612 = vmatpush1.msra.mxu0 0.0
        %613 = vmatprep.subr.mxu0 0.0
        %614 = vmatpush1.msra.mxu0 0.0
        %615 = vmatprep.subr.mxu0 0.0
        %616 = vmatpush1.msra.mxu0 0.0
        %617 = vmatprep.subr.mxu0 0.0
        %618 = vmatpush1.msra.mxu0 0.0
        %619 = vmatprep.subr.mxu0 0.0
        %620 = vmatpush1.msra.mxu0 0.0
        %621 = vmatprep.subr.mxu0 0.0
        %622 = vmatpush1.msra.mxu0 0.0
        %623 = vmatprep.subr.mxu0 0.0
        %624 = vmatpush1.msra.mxu0 0.0
        %625 = vmatprep.subr.mxu0 0.0
        %626 = vmatpush1.msra.mxu0 0.0
        %627 = vmatprep.subr.mxu0 0.0
        %628 = vmatpush1.msra.mxu0 0.0
        %629 = vmatprep.subr.mxu0 0.0
        %630 = vmatpush1.msra.mxu0 0.0
        %631 = vmatprep.subr.mxu0 0.0
        %632 = vmatpush1.msra.mxu0 0.0
        %633 = vmatprep.subr.mxu0 0.0
        %634 = vmatpush1.msra.mxu0 %v592
        %635 = vmatprep.subr.mxu0 0.0
        %636 = vmatpush1.msra.mxu0 %v591
        %637 = vmatprep.subr.mxu0 0.0
        %638 = vmatpush1.msra.mxu0 %v590
        %639 = vmatprep.subr.mxu0 0.0
        %640 = vmatpush1.msra.mxu0 %v589
        %641 = vmatprep.subr.mxu0 0.0
        %642 = vmatpush2.msra.mxu0 0.0
        %643 = vmatprep.subr.mxu0 0.0
        %644 = vmatpush2.msra.mxu0 0.0
        %645 = vmatprep.subr.mxu0 0.0
        %646 = vmatpush2.msra.mxu0 0.0
        %647 = vmatprep.subr.mxu0 0.0
        %648 = vmatpush2.msra.mxu0 0.0
        %649 = vmatprep.subr.mxu0 0.0
        %650 = vmatpush2.msra.mxu0 0.0
        %651 = vmatprep.subr.mxu0 0.0
        %652 = vmatpush2.msra.mxu0 0.0
        %653 = vmatprep.subr.mxu0 0.0
        %654 = vmatpush2.msra.mxu0 0.0
        %655 = vmatprep.subr.mxu0 0.0
        %656 = vmatpush2.msra.mxu0 0.0
        %657 = vmatprep.subr.mxu0 0.0
        %658 = vmatpush2.msra.mxu0 0.0
        %659 = vmatprep.subr.mxu0 0.0
        %660 = vmatpush2.msra.mxu0 0.0
        %661 = vmatprep.subr.mxu0 0.0
        %662 = vmatpush2.msra.mxu0 0.0
        %663 = vmatprep.subr.mxu0 0.0
        %664 = vmatpush2.msra.mxu0 0.0
        %665 = vmatprep.subr.mxu0 0.0
        %666 = vmatpush2.msra.mxu0 0.0
        %667 = vmatprep.subr.mxu0 0.0
        %668 = vmatpush2.msra.mxu0 0.0
        %669 = vmatprep.subr.mxu0 0.0
        %670 = vmatpush2.msra.mxu0 0.0
        %671 = vmatprep.subr.mxu0 0.0
        %672 = vmatpush2.msra.mxu0 0.0
        %673 = vmatprep.mubr.f32.mxu0 0.0
        %674 = vmatmul.mubr.f32.gmra.mxu0 %v605
        %v675 = vpop.f32.mrf.mxu0
        %v676 = vadd.f32 %v598, %v675
        %v677 = vpop.f32.mrf.mxu0
        %678 = vmatprep.mubr.f32.mxu0 0.0
        %679 = vmatmul.mubr.f32.gmra.mxu0 %v607
        %v680 = vpop.f32.mrf.mxu0
        %v681 = vadd.f32 %v603, %v680
        %v682 = vpop.f32.mrf.mxu0
        %683 = vdwg.mxu0
        %v684 = vld [vmem:[#allocation2] sm:$0x1]
        %vm685 = vcmask 130048
        %v687 = vsel %vm685, %v318, 0
        %v690 = vsel %vm685, %v676, 0
        %v693 = vsel %vm685, %v681, 0
        %695 = vmatprep.subr.mxu0 0.0
        %696 = vmatpush1.xpose.msra.mxu0 0.0
        %697 = vmatprep.subr.mxu0 0.0
        %698 = vmatpush1.xpose.msra.mxu0 0.0
        %699 = vmatprep.subr.mxu0 0.0
        %700 = vmatpush1.xpose.msra.mxu0 0.0
        %701 = vmatprep.subr.mxu0 0.0
        %702 = vmatpush1.xpose.msra.mxu0 0.0
        %703 = vmatprep.subr.mxu0 0.0
        %704 = vmatpush1.xpose.msra.mxu0 0.0
        %705 = vmatprep.subr.mxu0 0.0
        %706 = vmatpush1.xpose.msra.mxu0 0.0
        %707 = vmatprep.subr.mxu0 0.0
        %708 = vmatpush1.xpose.msra.mxu0 0.0
        %709 = vmatprep.subr.mxu0 0.0
        %710 = vmatpush1.xpose.msra.mxu0 0.0
        %711 = vmatprep.subr.mxu0 0.0
        %712 = vmatpush1.xpose.msra.mxu0 0.0
        %713 = vmatprep.subr.mxu0 0.0
        %714 = vmatpush1.xpose.msra.mxu0 0.0
        %715 = vmatprep.subr.mxu0 0.0
        %716 = vmatpush1.xpose.msra.mxu0 0.0
        %717 = vmatprep.subr.mxu0 0.0
        %718 = vmatpush1.xpose.msra.mxu0 0.0
        %719 = vmatprep.subr.mxu0 0.0
        %720 = vmatpush1.xpose.msra.mxu0 0.0
        %721 = vmatprep.subr.mxu0 0.0
        %722 = vmatpush1.xpose.msra.mxu0 0.0
        %723 = vmatprep.subr.mxu0 0.0
        %724 = vmatpush1.xpose.msra.mxu0 %v693
        %725 = vmatprep.subr.mxu0 0.0
        %726 = vmatpush1.xpose.msra.mxu0 %v690
        %727 = vmatprep.subr.mxu0 0.0
        %728 = vmatpush2.xpose.msra.mxu0 0.0
        %729 = vmatprep.subr.mxu0 0.0
        %730 = vmatpush2.xpose.msra.mxu0 0.0
        %731 = vmatprep.subr.mxu0 0.0
        %732 = vmatpush2.xpose.msra.mxu0 0.0
        %733 = vmatprep.subr.mxu0 0.0
        %734 = vmatpush2.xpose.msra.mxu0 0.0
        %735 = vmatprep.subr.mxu0 0.0
        %736 = vmatpush2.xpose.msra.mxu0 0.0
        %737 = vmatprep.subr.mxu0 0.0
        %738 = vmatpush2.xpose.msra.mxu0 0.0
        %739 = vmatprep.subr.mxu0 0.0
        %740 = vmatpush2.xpose.msra.mxu0 0.0
        %741 = vmatprep.subr.mxu0 0.0
        %742 = vmatpush2.xpose.msra.mxu0 0.0
        %743 = vmatprep.subr.mxu0 0.0
        %744 = vmatpush2.xpose.msra.mxu0 0.0
        %745 = vmatprep.subr.mxu0 0.0
        %746 = vmatpush2.xpose.msra.mxu0 0.0
        %747 = vmatprep.subr.mxu0 0.0
        %748 = vmatpush2.xpose.msra.mxu0 0.0
        %749 = vmatprep.subr.mxu0 0.0
        %750 = vmatpush2.xpose.msra.mxu0 0.0
        %751 = vmatprep.subr.mxu0 0.0
        %752 = vmatpush2.xpose.msra.mxu0 0.0
        %753 = vmatprep.subr.mxu0 0.0
        %754 = vmatpush2.xpose.msra.mxu0 0.0
        %755 = vmatprep.subr.mxu0 0.0
        %756 = vmatpush2.xpose.msra.mxu0 0.0
        %757 = vmatprep.subr.mxu0 0.0
        %758 = vmatpush2.xpose.msra.mxu0 0.0
        %759 = vmatprep.mubr.f32.mxu0 0.0
        %760 = vmatmul.mubr.f32.gmra.mxu0 %v687
        %v761 = vpop.f32.mrf.mxu0
        %v762 = vadd.f32 0.0, %v761
        %v763 = vpop.f32.mrf.mxu0
        %764 = vdwg.mxu0
        %v765 = vadd.f32 %v684, %v762
        %vm766 = vcmask 122880
        %767 = vst.msk [vmem:[#allocation2] sm:$0x1] %vm766, %v765
        // Predicated region
        $region53: #{tpu_custom_call.1} parent=47 // pred_check
          %p768 = pneg %p303
        $region54: #{tpu_custom_call.1} parent=47 // pred_check_branch
          %770 = sbr.rel (%p768) target = $region56
        $region55: #{tpu_custom_call.1} parent=47 // pred_region
          %v771 = vld [vmem:[#allocation2] sm:$0x1]
          %v772 = vld [vmem:[%s5] sm:$0xff]
          %v773 = vld [vmem:[%s5 + $0x8] sm:$0xff]
          %v774 = vld [vmem:[%s5 + $0x10] sm:$0x1]
          %v776 = vsel %vm685, %v771, 0
          %778 = vmatprep.subr.mxu0 0.0
          %779 = vmatpush1.msra.mxu0 0.0
          %780 = vmatprep.subr.mxu0 0.0
          %781 = vmatpush1.msra.mxu0 0.0
          %782 = vmatprep.subr.mxu0 0.0
          %783 = vmatpush1.msra.mxu0 0.0
          %784 = vmatprep.subr.mxu0 0.0
          %785 = vmatpush1.msra.mxu0 0.0
          %786 = vmatprep.subr.mxu0 0.0
          %787 = vmatpush1.msra.mxu0 0.0
          %788 = vmatprep.subr.mxu0 0.0
          %789 = vmatpush1.msra.mxu0 0.0
          %790 = vmatprep.subr.mxu0 0.0
          %791 = vmatpush1.msra.mxu0 0.0
          %792 = vmatprep.subr.mxu0 0.0
          %793 = vmatpush1.msra.mxu0 0.0
          %794 = vmatprep.subr.mxu0 0.0
          %795 = vmatpush1.msra.mxu0 0.0
          %796 = vmatprep.subr.mxu0 0.0
          %797 = vmatpush1.msra.mxu0 0.0
          %798 = vmatprep.subr.mxu0 0.0
          %799 = vmatpush1.msra.mxu0 0.0
          %800 = vmatprep.subr.mxu0 0.0
          %801 = vmatpush1.msra.mxu0 0.0
          %802 = vmatprep.subr.mxu0 0.0
          %803 = vmatpush1.msra.mxu0 0.0
          %804 = vmatprep.subr.mxu0 0.0
          %805 = vmatpush1.msra.mxu0 0.0
          %806 = vmatprep.subr.mxu0 0.0
          %807 = vmatpush1.msra.mxu0 %v773
          %808 = vmatprep.subr.mxu0 0.0
          %809 = vmatpush1.msra.mxu0 %v772
          %810 = vmatprep.subr.mxu0 0.0
          %811 = vmatpush2.msra.mxu0 0.0
          %812 = vmatprep.subr.mxu0 0.0
          %813 = vmatpush2.msra.mxu0 0.0
          %814 = vmatprep.subr.mxu0 0.0
          %815 = vmatpush2.msra.mxu0 0.0
          %816 = vmatprep.subr.mxu0 0.0
          %817 = vmatpush2.msra.mxu0 0.0
          %818 = vmatprep.subr.mxu0 0.0
          %819 = vmatpush2.msra.mxu0 0.0
          %820 = vmatprep.subr.mxu0 0.0
          %821 = vmatpush2.msra.mxu0 0.0
          %822 = vmatprep.subr.mxu0 0.0
          %823 = vmatpush2.msra.mxu0 0.0
          %824 = vmatprep.subr.mxu0 0.0
          %825 = vmatpush2.msra.mxu0 0.0
          %826 = vmatprep.subr.mxu0 0.0
          %827 = vmatpush2.msra.mxu0 0.0
          %828 = vmatprep.subr.mxu0 0.0
          %829 = vmatpush2.msra.mxu0 0.0
          %830 = vmatprep.subr.mxu0 0.0
          %831 = vmatpush2.msra.mxu0 0.0
          %832 = vmatprep.subr.mxu0 0.0
          %833 = vmatpush2.msra.mxu0 0.0
          %834 = vmatprep.subr.mxu0 0.0
          %835 = vmatpush2.msra.mxu0 0.0
          %836 = vmatprep.subr.mxu0 0.0
          %837 = vmatpush2.msra.mxu0 0.0
          %838 = vmatprep.subr.mxu0 0.0
          %839 = vmatpush2.msra.mxu0 0.0
          %840 = vmatprep.subr.mxu0 0.0
          %841 = vmatpush2.msra.mxu0 0.0
          %842 = vmatprep.mubr.f32.mxu0 0.0
          %843 = vmatmul.mubr.f32.gmra.mxu0 %v776
          %v844 = vpop.f32.mrf.mxu0
          %v845 = vadd.f32 %v774, %v844
          %v846 = vpop.f32.mrf.mxu0
          %847 = vdwg.mxu0
          %v848 = vmax.f32 %v845, 0.0
          %v849 = vld [vmem:[%s6] sm:$0xff]
          %v850 = vld [vmem:[%s6 + $0x8] sm:$0xff]
          %v851 = vld [vmem:[%s6 + $0x10] sm:$0xff]
          %v852 = vld [vmem:[%s6 + $0x18] sm:$0xff]
          %v853 = vld [vmem:[%s6 + $0x20] sm:$0x1]
          %v855 = vsel %vm495, %v848, 0
          %857 = vmatprep.subr.mxu0 0.0
          %858 = vmatpush1.msra.mxu0 0.0
          %859 = vmatprep.subr.mxu0 0.0
          %860 = vmatpush1.msra.mxu0 0.0
          %861 = vmatprep.subr.mxu0 0.0
          %862 = vmatpush1.msra.mxu0 0.0
          %863 = vmatprep.subr.mxu0 0.0
          %864 = vmatpush1.msra.mxu0 0.0
          %865 = vmatprep.subr.mxu0 0.0
          %866 = vmatpush1.msra.mxu0 0.0
          %867 = vmatprep.subr.mxu0 0.0
          %868 = vmatpush1.msra.mxu0 0.0
          %869 = vmatprep.subr.mxu0 0.0
          %870 = vmatpush1.msra.mxu0 0.0
          %871 = vmatprep.subr.mxu0 0.0
          %872 = vmatpush1.msra.mxu0 0.0
          %873 = vmatprep.subr.mxu0 0.0
          %874 = vmatpush1.msra.mxu0 0.0
          %875 = vmatprep.subr.mxu0 0.0
          %876 = vmatpush1.msra.mxu0 0.0
          %877 = vmatprep.subr.mxu0 0.0
          %878 = vmatpush1.msra.mxu0 0.0
          %879 = vmatprep.subr.mxu0 0.0
          %880 = vmatpush1.msra.mxu0 0.0
          %881 = vmatprep.subr.mxu0 0.0
          %882 = vmatpush1.msra.mxu0 %v852
          %883 = vmatprep.subr.mxu0 0.0
          %884 = vmatpush1.msra.mxu0 %v851
          %885 = vmatprep.subr.mxu0 0.0
          %886 = vmatpush1.msra.mxu0 %v850
          %887 = vmatprep.subr.mxu0 0.0
          %888 = vmatpush1.msra.mxu0 %v849
          %889 = vmatprep.subr.mxu0 0.0
          %890 = vmatpush2.msra.mxu0 0.0
          %891 = vmatprep.subr.mxu0 0.0
          %892 = vmatpush2.msra.mxu0 0.0
          %893 = vmatprep.subr.mxu0 0.0
          %894 = vmatpush2.msra.mxu0 0.0
          %895 = vmatprep.subr.mxu0 0.0
          %896 = vmatpush2.msra.mxu0 0.0
          %897 = vmatprep.subr.mxu0 0.0
          %898 = vmatpush2.msra.mxu0 0.0
          %899 = vmatprep.subr.mxu0 0.0
          %900 = vmatpush2.msra.mxu0 0.0
          %901 = vmatprep.subr.mxu0 0.0
          %902 = vmatpush2.msra.mxu0 0.0
          %903 = vmatprep.subr.mxu0 0.0
          %904 = vmatpush2.msra.mxu0 0.0
          %905 = vmatprep.subr.mxu0 0.0
          %906 = vmatpush2.msra.mxu0 0.0
          %907 = vmatprep.subr.mxu0 0.0
          %908 = vmatpush2.msra.mxu0 0.0
          %909 = vmatprep.subr.mxu0 0.0
          %910 = vmatpush2.msra.mxu0 0.0
          %911 = vmatprep.subr.mxu0 0.0
          %912 = vmatpush2.msra.mxu0 0.0
          %913 = vmatprep.subr.mxu0 0.0
          %914 = vmatpush2.msra.mxu0 0.0
          %915 = vmatprep.subr.mxu0 0.0
          %916 = vmatpush2.msra.mxu0 0.0
          %917 = vmatprep.subr.mxu0 0.0
          %918 = vmatpush2.msra.mxu0 0.0
          %919 = vmatprep.subr.mxu0 0.0
          %920 = vmatpush2.msra.mxu0 0.0
          %921 = vmatprep.mubr.f32.mxu0 0.0
          %922 = vmatmul.mubr.f32.gmra.mxu0 %v855
          %v923 = vpop.f32.mrf.mxu0
          %v924 = vadd.f32 %v853, %v923
          %v925 = vpop.f32.mrf.mxu0
          %926 = vdwg.mxu0
          %v927 = vmax.f32 %v924, 0.0
          %v928 = vld [vmem:[%s7] sm:$0xff]
          %v929 = vld [vmem:[%s7 + $0x8] sm:$0xff]
          %v930 = vld [vmem:[%s7 + $0x10] sm:$0xff]
          %v931 = vld [vmem:[%s7 + $0x18] sm:$0xff]
          %v932 = vld [vmem:[%s7 + $0x20] sm:$0x1]
          %v934 = vsel %vm495, %v927, 0
          %936 = vmatprep.subr.mxu0 0.0
          %937 = vmatpush1.msra.mxu0 0.0
          %938 = vmatprep.subr.mxu0 0.0
          %939 = vmatpush1.msra.mxu0 0.0
          %940 = vmatprep.subr.mxu0 0.0
          %941 = vmatpush1.msra.mxu0 0.0
          %942 = vmatprep.subr.mxu0 0.0
          %943 = vmatpush1.msra.mxu0 0.0
          %944 = vmatprep.subr.mxu0 0.0
          %945 = vmatpush1.msra.mxu0 0.0
          %946 = vmatprep.subr.mxu0 0.0
          %947 = vmatpush1.msra.mxu0 0.0
          %948 = vmatprep.subr.mxu0 0.0
          %949 = vmatpush1.msra.mxu0 0.0
          %950 = vmatprep.subr.mxu0 0.0
          %951 = vmatpush1.msra.mxu0 0.0
          %952 = vmatprep.subr.mxu0 0.0
          %953 = vmatpush1.msra.mxu0 0.0
          %954 = vmatprep.subr.mxu0 0.0
          %955 = vmatpush1.msra.mxu0 0.0
          %956 = vmatprep.subr.mxu0 0.0
          %957 = vmatpush1.msra.mxu0 0.0
          %958 = vmatprep.subr.mxu0 0.0
          %959 = vmatpush1.msra.mxu0 0.0
          %960 = vmatprep.subr.mxu0 0.0
          %961 = vmatpush1.msra.mxu0 %v931
          %962 = vmatprep.subr.mxu0 0.0
          %963 = vmatpush1.msra.mxu0 %v930
          %964 = vmatprep.subr.mxu0 0.0
          %965 = vmatpush1.msra.mxu0 %v929
          %966 = vmatprep.subr.mxu0 0.0
          %967 = vmatpush1.msra.mxu0 %v928
          %968 = vmatprep.subr.mxu0 0.0
          %969 = vmatpush2.msra.mxu0 0.0
          %970 = vmatprep.subr.mxu0 0.0
          %971 = vmatpush2.msra.mxu0 0.0
          %972 = vmatprep.subr.mxu0 0.0
          %973 = vmatpush2.msra.mxu0 0.0
          %974 = vmatprep.subr.mxu0 0.0
          %975 = vmatpush2.msra.mxu0 0.0
          %976 = vmatprep.subr.mxu0 0.0
          %977 = vmatpush2.msra.mxu0 0.0
          %978 = vmatprep.subr.mxu0 0.0
          %979 = vmatpush2.msra.mxu0 0.0
          %980 = vmatprep.subr.mxu0 0.0
          %981 = vmatpush2.msra.mxu0 0.0
          %982 = vmatprep.subr.mxu0 0.0
          %983 = vmatpush2.msra.mxu0 0.0
          %984 = vmatprep.subr.mxu0 0.0
          %985 = vmatpush2.msra.mxu0 0.0
          %986 = vmatprep.subr.mxu0 0.0
          %987 = vmatpush2.msra.mxu0 0.0
          %988 = vmatprep.subr.mxu0 0.0
          %989 = vmatpush2.msra.mxu0 0.0
          %990 = vmatprep.subr.mxu0 0.0
          %991 = vmatpush2.msra.mxu0 0.0
          %992 = vmatprep.subr.mxu0 0.0
          %993 = vmatpush2.msra.mxu0 0.0
          %994 = vmatprep.subr.mxu0 0.0
          %995 = vmatpush2.msra.mxu0 0.0
          %996 = vmatprep.subr.mxu0 0.0
          %997 = vmatpush2.msra.mxu0 0.0
          %998 = vmatprep.subr.mxu0 0.0
          %999 = vmatpush2.msra.mxu0 0.0
          %1000 = vmatprep.mubr.f32.mxu0 0.0
          %1001 = vmatmul.mubr.f32.gmra.mxu0 %v934
          %v1002 = vpop.f32.mrf.mxu0
          %v1003 = vadd.f32 %v932, %v1002
          %v1004 = vpop.f32.mrf.mxu0
          %1005 = vdwg.mxu0
          %vm1006 = vcmask 253952
          %1007 = vst.msk [vmem:[%s295] sm:$0x1] %vm1006, %v1003
        $region56: #{tpu_custom_call.1} parent=47 // pred_fallthru
          _
        %s1008 = sand.u32 %s202, 1
        %s1009 = scalar_lea.sflag [#allocation6], %s1008
        %s1010 = sand.u32 %s202, 1
        %s1011 = scalar_lea.vmem [#allocation5], %s1010
        // Predicated region
        $region57: #{tpu_custom_call.1} parent=47 // pred_check
          %p1012 = pneg %p212
        $region58: #{tpu_custom_call.1} parent=47 // pred_check_branch
          %1014 = sbr.rel (%p1012) target = $region60
        $region59: #{tpu_custom_call.1} parent=47 // pred_region
          %s1016 = ssub.s32 16, 16
          %1017 = vsyncadd %s1009, %s1016
          %s1018 = smul.addr %s32, 16
          %s1019 = scalar_lea.hbm %s8, %s1018
          %s1021 = sshll.u32 %s1011, 4
          %s1022 = int_to_ptr.vmem [resolvable:$true] %s1021
          %1024 = dma.vmem_to_hbm [thread:$0]  %s1022, 16, %s1019, %s1009
        $region60: #{tpu_custom_call.1} parent=47 // pred_fallthru
          _
      $region48: #{tpu_custom_call.1} parent=5 // pred_fallthru
        _
      %p1025 = scmp.le.s32.totalorder 2, %s23
      // Predicated region
      $region61: #{tpu_custom_call.1} parent=5 // pred_check
        %p1026 = pneg %p1025
      $region62: #{tpu_custom_call.1} parent=5 // pred_check_branch
        %1028 = sbr.rel (%p1026) target = $region64
      $region63: #{tpu_custom_call.1} parent=5 // pred_region
        %s1029 = ssub.s32 %s23, 2
        // Predicated region
        $region65: #{tpu_custom_call.1} parent=63 // pred_check
          %p1030 = pneg %p218
        $region66: #{tpu_custom_call.1} parent=63 // pred_check_branch
          %1032 = sbr.rel (%p1030) target = $region68
        $region67: #{tpu_custom_call.1} parent=63 // pred_region
          %s1033 = sand.u32 %s203, 1
          %s1034 = scalar_lea.sflag [#allocation6], %s1033
          %s1035 = sand.u32 %s203, 1
          %s1036 = scalar_lea.vmem [#allocation5], %s1035
          %1037 = dma.done %s1034, 16
        $region68: #{tpu_custom_call.1} parent=63 // pred_fallthru
          _
      $region64: #{tpu_custom_call.1} parent=5 // pred_fallthru
        _
    $region6: #{tpu_custom_call.1} parent=1 // loop_footer
      %s27 = sadd.s32 1, %s23
    $region7: #{tpu_custom_call.1} parent=1 // loop_footer_branch
      %22 = sbr.rel target = $region3
    $region8: #{tpu_custom_call.1} parent=1 // loop_exit
      _
    %1038 = vsyncpa [#allocation6], 1
    %s1039 = scalar_lea.sflag [#allocation6], 1
    %1040 = vsyncpa %s1039, 1

</llo_original>
